<compile_context>
chip_gen: v7x
topology: tpu7x:2x2x1
jax: 0.10.0
libtpu: 0.0.40
codegen_flags: <defaults>
</compile_context>

<pallas_src>
import functools

import jax
import jax.numpy as jnp
import numpy as np
from jax.experimental import pallas as pl
from jax.experimental.pallas import tpu as pltpu


def _grn_kernel(x_ref, gamma_ref, beta_ref, o_ref, *, k, c):
    """One grid step = one image.  x block: (1, R, k*c), R = H*W / k (lane-dense)."""
    x32 = x_ref[0].astype(jnp.float32)                        # (R, k*c), f32 accumulation
    ssq = jnp.sum(x32 * x32, axis=0, keepdims=True)           # (1, k*c) per-lane sum of squares

    if k > 1:
        # Fold the k spatial positions packed along lanes back into per-channel sums with a
        # tiny 0/1 matmul: fold[l, ch] = (l % c == ch).  MXU, essentially free, robust lowering.
        lane = jax.lax.broadcasted_iota(jnp.int32, (k * c, c), 0)
        ch = jax.lax.broadcasted_iota(jnp.int32, (k * c, c), 1)
        fold = (lane % c == ch).astype(jnp.float32)            # (k*c, c)
        ssq = jnp.dot(ssq, fold, preferred_element_type=jnp.float32)   # (1, c)

    gx = jnp.sqrt(ssq)                                         # (1, c)  L2 over spatial dims
    nx = gx / (jnp.mean(gx, axis=-1, keepdims=True) + 1e-6)    # (1, c)  divisive norm

    # Fused epilogue: gamma*(x*Nx) + beta + x == x * (gamma*Nx + 1) + beta.
    scale = gamma_ref[...] * nx + 1.0                          # (1, c)
    shift = beta_ref[...]                                      # (1, c)

    if k > 1:
        # Re-expand per-channel vectors to the packed lane layout (lane l -> channel l % c).
        ch2 = jax.lax.broadcasted_iota(jnp.int32, (c, k * c), 0)
        lane2 = jax.lax.broadcasted_iota(jnp.int32, (c, k * c), 1)
        expand = (lane2 % c == ch2).astype(jnp.float32)         # (c, k*c)
        scale = jnp.dot(scale, expand, preferred_element_type=jnp.float32)
        shift = jnp.dot(shift, expand, preferred_element_type=jnp.float32)

    o_ref[0] = (x32 * scale + shift).astype(o_ref.dtype)


def grn_forward(x, gamma, beta):
    """x: (B, H, W, C); gamma/beta: (1, 1, 1, C).  Returns (B, H, W, C) in x.dtype."""
    B, H, W, C = x.shape
    HW = H * W

    # Lane-density: pack k spatial positions per row when C does not fill the 128-wide
    # lane axis.  (B, HW, C) -> (B, HW//k, k*C) is a contiguous reshape: zero HBM cost.
    if C % 128 != 0 and 128 % C == 0 and HW % (128 // C) == 0:
        k = 128 // C
    else:
        k = 1
    R = HW // k
    KC = k * C

    xf = x.reshape(B, R, KC)
    g = jnp.asarray(gamma, jnp.float32).reshape(1, C)
    b = jnp.asarray(beta, jnp.float32).reshape(1, C)

    # VMEM budget: BlockSpec double-buffers both the input and output image slabs.
    slab = R * KC * x.dtype.itemsize
    slack = 2 * C * 4 + (2 << 20)                      # params + layout/scratch headroom
    try:
        vmem_cap = int(pltpu.get_tpu_info().vmem_capacity_bytes)
    except Exception:
        vmem_cap = 64 * 1024 * 1024                    # conservative (v7x per-core VMEM)

    need_double = 4 * slab + slack
    if need_double <= int(0.85 * vmem_cap):
        pipeline_mode = None                            # default: double-buffered in & out
        vmem_limit = need_double
    else:
        # Halve peak VMEM by single-buffering the big slabs; the un-hidden compute tail is
        # tiny since the kernel is HBM-bound.  (v5e scoped default / v7x 64 MiB relief.)
        pipeline_mode = pl.Buffered(1)
        vmem_limit = 2 * slab + slack
    vmem_limit = int(min(max(vmem_limit, 8 << 20), vmem_cap))
    # TODO(synk): if even a single-buffered slab exceeds VMEM (very large H*W), switch to a
    # row-tiled two-phase pipeline keeping ONE resident image in VMEM scratch (stream tiles
    # in, accumulate per-channel sum-of-squares, then stream affine-applied tiles out).

    def big_spec():
        if pipeline_mode is None:
            return pl.BlockSpec((1, R, KC), lambda i: (i, 0, 0))
        return pl.BlockSpec((1, R, KC), lambda i: (i, 0, 0), pipeline_mode=pipeline_mode)

    out = pl.pallas_call(
        functools.partial(_grn_kernel, k=k, c=C),
        out_shape=jax.ShapeDtypeStruct((B, R, KC), x.dtype),
        grid=(B,),
        in_specs=[
            big_spec(),                                         # x: one full image per step
            pl.BlockSpec((1, C), lambda i: (0, 0)),             # gamma (shared, f32)
            pl.BlockSpec((1, C), lambda i: (0, 0)),             # beta  (shared, f32)
        ],
        out_specs=big_spec(),
        compiler_params=pltpu.CompilerParams(
            dimension_semantics=("parallel",),                  # megacore: one image per TC
            vmem_limit_bytes=vmem_limit,
        ),
    )(xf, g, b)
    return out.reshape(B, H, W, C)


def grn_reference(x, gamma, beta):
    """Pure-JAX mirror of the PyTorch forward (computed in f32)."""
    x = jnp.asarray(x, jnp.float32)
    gx = jnp.sqrt(jnp.sum(x * x, axis=(1, 2), keepdims=True))
    nx = gx / (jnp.mean(gx, axis=-1, keepdims=True) + 1e-6)
    return gamma * (x * nx) + beta + x


if __name__ == "__main__":
    B, H, W, C = 2, 16, 16, 32
    key = jax.random.PRNGKey(0)
    kx, kg, kb = jax.random.split(key, 3)

    x = jax.random.normal(kx, (B, H, W, C), dtype=jnp.float32)
    # PyTorch initializes gamma/beta to zeros (output == x); use nonzero values so the
    # normalization path is actually exercised by the check.
    gamma = (0.5 + 0.1 * jax.random.normal(kg, (1, 1, 1, C))).astype(jnp.float32)
    beta = (0.1 * jax.random.normal(kb, (1, 1, 1, C))).astype(jnp.float32)

    # float32 path
    out = jax.block_until_ready(grn_forward(x, gamma, beta))
    assert out.shape == (B, H, W, C) and out.dtype == x.dtype, (out.shape, out.dtype)
    ref = grn_reference(x, gamma, beta)
    np.testing.assert_allclose(np.asarray(out), np.asarray(ref), rtol=1e-5, atol=1e-5)

    # bfloat16 path: native-dtype HBM I/O, f32 accumulation inside the kernel.
    xb = x.astype(jnp.bfloat16)
    outb = jax.block_until_ready(grn_forward(xb, gamma, beta))
    assert outb.dtype == jnp.bfloat16, outb.dtype
    refb = grn_reference(xb.astype(jnp.float32), gamma, beta)
    np.testing.assert_allclose(np.asarray(outb.astype(jnp.float32)), np.asarray(refb),
                               rtol=2e-2, atol=2e-2)

    print("KERNEL_OK")
</pallas_src>

<mosaic_0001>
module attributes {stable_mosaic.version = 11 : i64} {
  func.func @_grn_kernel(%arg0: i32, %arg1: memref<1x64x128xf32, #tpu.memory_space<vmem>>, %arg2: memref<1x32xf32, #tpu.memory_space<vmem>>, %arg3: memref<1x32xf32, #tpu.memory_space<vmem>>, %arg4: memref<1x64x128xf32, #tpu.memory_space<vmem>>) attributes {dimension_semantics = [#tpu.dimension_semantics<parallel>], iteration_bounds = array<i64: 2>, scalar_prefetch = 0 : i64, scratch_operands = 0 : i64, tpu.core_type = #tpu.core_type<tc>, window_params = [{transform_indices = @transform_0, window_bounds = array<i64: 1, 64, 128>}, {pipeline_mode = #tpu.pipeline_mode<synchronous>, transform_indices = @transform_1, window_bounds = array<i64: 1, 32>}, {pipeline_mode = #tpu.pipeline_mode<synchronous>, transform_indices = @transform_2, window_bounds = array<i64: 1, 32>}, {transform_indices = @transform_3, window_bounds = array<i64: 1, 64, 128>}]} {
    %c0 = arith.constant 0 : index
    %c0_0 = arith.constant 0 : index
    %c0_1 = arith.constant 0 : index
    %0 = vector.load %arg1[%c0, %c0_0, %c0_1] : memref<1x64x128xf32, #tpu.memory_space<vmem>>, vector<1x64x128xf32>
    %1 = vector.shape_cast %0 : vector<1x64x128xf32> to vector<64x128xf32>
    %2 = arith.mulf %1, %1 : vector<64x128xf32>
    %cst = arith.constant dense<0.000000e+00> : vector<128xf32>
    %3 = vector.multi_reduction <add>, %2, %cst [0] : vector<64x128xf32> to vector<128xf32>
    %4 = vector.shape_cast %3 : vector<128xf32> to vector<1x128xf32>
    %5 = tpu.iota {dimensions = array<i32: 0>} : vector<128x32xi32>
    %6 = tpu.iota {dimensions = array<i32: 1>} : vector<128x32xi32>
    %c32_i32 = arith.constant 32 : i32
    %c0_i32 = arith.constant 0 : i32
    %7 = arith.cmpi eq, %c32_i32, %c0_i32 : i32
    %c1_i32 = arith.constant 1 : i32
    %8 = arith.select %7, %c1_i32, %c32_i32 : i32
    %9 = vector.broadcast %8 : i32 to vector<128x32xi32>
    %10 = arith.remsi %5, %9 : vector<128x32xi32>
    %c0_i32_2 = arith.constant 0 : i32
    %11 = vector.broadcast %c0_i32_2 : i32 to vector<128x32xi32>
    %12 = arith.cmpi ne, %10, %11 : vector<128x32xi32>
    %c0_i32_3 = arith.constant 0 : i32
    %13 = vector.broadcast %c0_i32_3 : i32 to vector<128x32xi32>
    %14 = arith.cmpi slt, %10, %13 : vector<128x32xi32>
    %c0_i32_4 = arith.constant 0 : i32
    %15 = arith.cmpi slt, %8, %c0_i32_4 : i32
    %16 = vector.broadcast %15 : i1 to vector<128x32xi1>
    %17 = vector.broadcast %16 : vector<128x32xi1> to vector<128x32xi1>
    %18 = arith.xori %14, %17 : vector<128x32xi1>
    %19 = arith.andi %18, %12 : vector<128x32xi1>
    %20 = vector.broadcast %8 : i32 to vector<128x32xi32>
    %21 = arith.addi %10, %20 : vector<128x32xi32>
    %22 = arith.select %19, %21, %10 : vector<128x32xi1>, vector<128x32xi32>
    %23 = arith.cmpi eq, %22, %6 : vector<128x32xi32>
    %24 = arith.extui %23 : vector<128x32xi1> to vector<128x32xi32>
    %25 = arith.sitofp %24 : vector<128x32xi32> to vector<128x32xf32>
    %cst_5 = arith.constant dense<0.000000e+00> : vector<1x32xf32>
    %26 = tpu.matmul %4, %25, %cst_5 {dimension_numbers = #tpu.dot_dimension_numbers<[1], [0], [0], [1], [0, 0, 1, 1], [], []>} : vector<1x128xf32>, vector<128x32xf32>, vector<1x32xf32> -> vector<1x32xf32>
    %27 = math.sqrt %26 : vector<1x32xf32>
    %cst_6 = arith.constant dense<0.000000e+00> : vector<1xf32>
    %28 = vector.multi_reduction <add>, %27, %cst_6 [1] : vector<1x32xf32> to vector<1xf32>
    %29 = vector.shape_cast %28 : vector<1xf32> to vector<1x1xf32>
    %cst_7 = arith.constant 3.200000e+01 : f32
    %30 = vector.broadcast %cst_7 : f32 to vector<1x1xf32>
    %31 = arith.divf %29, %30 : vector<1x1xf32>
    %cst_8 = arith.constant 9.99999997E-7 : f32
    %32 = vector.broadcast %cst_8 : f32 to vector<1x1xf32>
    %33 = arith.addf %31, %32 : vector<1x1xf32>
    %34 = vector.broadcast %33 : vector<1x1xf32> to vector<1x32xf32>
    %35 = arith.divf %27, %34 : vector<1x32xf32>
    %c0_9 = arith.constant 0 : index
    %c0_10 = arith.constant 0 : index
    %36 = vector.load %arg2[%c0_9, %c0_10] : memref<1x32xf32, #tpu.memory_space<vmem>>, vector<1x32xf32>
    %37 = arith.mulf %36, %35 : vector<1x32xf32>
    %cst_11 = arith.constant 1.000000e+00 : f32
    %38 = vector.broadcast %cst_11 : f32 to vector<1x32xf32>
    %39 = arith.addf %37, %38 : vector<1x32xf32>
    %c0_12 = arith.constant 0 : index
    %c0_13 = arith.constant 0 : index
    %40 = vector.load %arg3[%c0_12, %c0_13] : memref<1x32xf32, #tpu.memory_space<vmem>>, vector<1x32xf32>
    %41 = tpu.iota {dimensions = array<i32: 0>} : vector<32x128xi32>
    %42 = tpu.iota {dimensions = array<i32: 1>} : vector<32x128xi32>
    %c32_i32_14 = arith.constant 32 : i32
    %c0_i32_15 = arith.constant 0 : i32
    %43 = arith.cmpi eq, %c32_i32_14, %c0_i32_15 : i32
    %c1_i32_16 = arith.constant 1 : i32
    %44 = arith.select %43, %c1_i32_16, %c32_i32_14 : i32
    %45 = vector.broadcast %44 : i32 to vector<32x128xi32>
    %46 = arith.remsi %42, %45 : vector<32x128xi32>
    %c0_i32_17 = arith.constant 0 : i32
    %47 = vector.broadcast %c0_i32_17 : i32 to vector<32x128xi32>
    %48 = arith.cmpi ne, %46, %47 : vector<32x128xi32>
    %c0_i32_18 = arith.constant 0 : i32
    %49 = vector.broadcast %c0_i32_18 : i32 to vector<32x128xi32>
    %50 = arith.cmpi slt, %46, %49 : vector<32x128xi32>
    %c0_i32_19 = arith.constant 0 : i32
    %51 = arith.cmpi slt, %44, %c0_i32_19 : i32
    %52 = vector.broadcast %51 : i1 to vector<32x128xi1>
    %53 = vector.broadcast %52 : vector<32x128xi1> to vector<32x128xi1>
    %54 = arith.xori %50, %53 : vector<32x128xi1>
    %55 = arith.andi %54, %48 : vector<32x128xi1>
    %56 = vector.broadcast %44 : i32 to vector<32x128xi32>
    %57 = arith.addi %46, %56 : vector<32x128xi32>
    %58 = arith.select %55, %57, %46 : vector<32x128xi1>, vector<32x128xi32>
    %59 = arith.cmpi eq, %58, %41 : vector<32x128xi32>
    %60 = arith.extui %59 : vector<32x128xi1> to vector<32x128xi32>
    %61 = arith.sitofp %60 : vector<32x128xi32> to vector<32x128xf32>
    %cst_20 = arith.constant dense<0.000000e+00> : vector<1x128xf32>
    %62 = tpu.matmul %39, %61, %cst_20 {dimension_numbers = #tpu.dot_dimension_numbers<[1], [0], [0], [1], [0, 0, 1, 1], [], []>} : vector<1x32xf32>, vector<32x128xf32>, vector<1x128xf32> -> vector<1x128xf32>
    %cst_21 = arith.constant dense<0.000000e+00> : vector<1x128xf32>
    %63 = tpu.matmul %40, %61, %cst_21 {dimension_numbers = #tpu.dot_dimension_numbers<[1], [0], [0], [1], [0, 0, 1, 1], [], []>} : vector<1x32xf32>, vector<32x128xf32>, vector<1x128xf32> -> vector<1x128xf32>
    %64 = vector.broadcast %62 : vector<1x128xf32> to vector<64x128xf32>
    %65 = arith.mulf %1, %64 : vector<64x128xf32>
    %66 = vector.broadcast %63 : vector<1x128xf32> to vector<64x128xf32>
    %67 = arith.addf %65, %66 : vector<64x128xf32>
    %c0_22 = arith.constant 0 : index
    %c0_23 = arith.constant 0 : index
    %c0_24 = arith.constant 0 : index
    %68 = vector.load %arg4[%c0_22, %c0_23, %c0_24] : memref<1x64x128xf32, #tpu.memory_space<vmem>>, vector<1x64x128xf32>
    %69 = vector.shape_cast %68 : vector<1x64x128xf32> to vector<64x128xf32>
    %70 = vector.shape_cast %67 : vector<64x128xf32> to vector<1x64x128xf32>
    tpu.vector_store %arg4[%c0_22, %c0_23, %c0_24], %70 {strides = array<i32>} : memref<1x64x128xf32, #tpu.memory_space<vmem>>, vector<1x64x128xf32>,
    return
  }
  func.func @transform_0(%arg0: i32) -> (i32, i32, i32) {
    %c0_i32 = arith.constant 0 : i32
    %c0_i32_0 = arith.constant 0 : i32
    %c0_i32_1 = arith.constant 0 : i32
    return %arg0, %c0_i32, %c0_i32_0 : i32, i32, i32
  }
  func.func @transform_1(%arg0: i32) -> (i32, i32) {
    %c0_i32 = arith.constant 0 : i32
    %c0_i32_0 = arith.constant 0 : i32
    %c0_i32_1 = arith.constant 0 : i32
    return %c0_i32, %c0_i32_0 : i32, i32
  }
  func.func @transform_2(%arg0: i32) -> (i32, i32) {
    %c0_i32 = arith.constant 0 : i32
    %c0_i32_0 = arith.constant 0 : i32
    %c0_i32_1 = arith.constant 0 : i32
    return %c0_i32, %c0_i32_0 : i32, i32
  }
  func.func @transform_3(%arg0: i32) -> (i32, i32, i32) {
    %c0_i32 = arith.constant 0 : i32
    %c0_i32_0 = arith.constant 0 : i32
    %c0_i32_1 = arith.constant 0 : i32
    return %arg0, %c0_i32, %c0_i32_0 : i32, i32, i32
  }
}

</mosaic_0001>

<llo_original>
// kernel: tpu_custom_call.1
$region0: #{tpu_custom_call.1}
  #allocation0 [shape = 'u32[]', space=smem, size = 0x4, offset = 0x4, fixed_abs, tag = 'smem constant byte address 0x4 - core index']
  #allocation1 [shape = 'u32[144,128]{1,0:T(1,128)}', space=vmem, size = 0x12000, scoped, tag = 'internal scratch']
  %s0 = inlined_call_operand.hbm [shape: f32[2,64,128], index: 0, kind: input, shape index: {}]
  %s1 = inlined_call_operand.vmem [shape: f32[1,32], index: 1, kind: input, shape index: {}]
  %s2 = inlined_call_operand.vmem [shape: f32[1,32], index: 2, kind: input, shape index: {}]
  %s3 = inlined_call_operand.hbm [shape: f32[2,64,128], index: 3, kind: output, shape index: {}]
  %s4 = sld [smem:[#allocation0]]
  $region49: #{tpu_custom_call.1} parent=0
    _
  %s6 = ssub.s32 1, %s4
  %s7 = scalar_select 0, %s6, %s4
  $region1: #{tpu_custom_call.1} parent=0
    #allocation2 [shape = 'u8[65536]{0}', space=vmem, size = 0x10000, scoped, tag = 'input window, operand 0']
    #allocation3 [shape = 's32[2]{0}', space=sflag, size = 0x8, scoped, tag = 'scoped memory for tpu_custom_call.1']
    #allocation4 [shape = 's32[2]{0}', space=sflag, size = 0x8, scoped, tag = 'scoped memory for tpu_custom_call.1']
    #allocation5 [shape = 'u8[65536]{0}', space=vmem, size = 0x10000, scoped, tag = 'output window, operand 0']
    %8 = vsyncpa [#allocation3], 0
    %s9 = scalar_lea.sflag [#allocation3], 1
    %10 = vsyncpa %s9, 0
    %11 = vsyncpa [#allocation4], 0
    %s12 = scalar_lea.sflag [#allocation4], 1
    %13 = vsyncpa %s12, 0
    loop: start=0, step=1, limit=4
    $region2: #{tpu_custom_call.1} parent=1 // loop_pre_header
      _
    $region3: #{tpu_custom_call.1} parent=1 // loop_header
      %s15 = sphi 0, %s19
      %p16 = scmp.ge.s32.totalorder %s15, 4
      %s25 = sphi 0, %s27
      %s28 = sphi 0, %s25
      %s29 = sphi 0, %s28
      %s45 = sphi 0, %s29
      %s49 = sphi 0, %s49
      %s51 = sphi 0, %s49
      %s52 = sphi 0, %s51
      %s66 = sphi 0, %s52
      %s70 = sphi 0, %s70
      %s72 = sphi 0, %s70
      %s73 = sphi 0, %s72
      %s87 = sphi 0, %s73
      %s93 = sphi 0, %s95
      %s96 = sphi 0, %s93
      %s97 = sphi 0, %s96
      %s113 = sphi 0, %s97
    $region4: #{tpu_custom_call.1} parent=1 // loop_header_branch
      %18 = sbr.rel (%p16) target = $region8
    $region5: #{tpu_custom_call.1} parent=1 // loop_body
      %s20 = ssub.s32 %s15, 1
      %s21 = ssub.s32 %s15, 2
      %s22 = sadd.s32 %s15, 1
      %s23 = ssub.s32 %s15, %s22
      %p24 = scmp.eq.s32.totalorder %s23, 0
      %s26 = sadd.s32 %s25, 1
      %s27 = scalar_select %p24, %s25, %s26
      %p30 = pneg %p24
      %p31 = scmp.eq.s32.totalorder %s15, 1
      %p32 = por %p30, %p31
      %p33 = scmp.ne.s32.totalorder %s25, %s28
      %p34 = scmp.eq.s32.totalorder %s15, 0
      %p35 = por %p33, %p34
      %p36 = scmp.ne.s32.totalorder %s25, %s28
      %p37 = scmp.eq.s32.totalorder %s20, 1
      %p38 = por %p36, %p37
      %p39 = scmp.ne.s32.totalorder %s28, %s29
      %p40 = scmp.eq.s32.totalorder %s20, 0
      %p41 = por %p39, %p40
      %p42 = scmp.ne.s32.totalorder %s28, %s29
      %p43 = scmp.eq.s32.totalorder %s21, 1
      %p44 = por %p42, %p43
      %p46 = scmp.ne.s32.totalorder %s29, %s45
      %p47 = scmp.eq.s32.totalorder %s21, 0
      %p48 = por %p46, %p47
      %s50 = sadd.s32 %s49, 1
      %p53 = scmp.eq.s32.totalorder %s15, 1
      %p54 = scmp.ne.s32.totalorder %s49, %s51
      %p55 = scmp.eq.s32.totalorder %s15, 0
      %p56 = por %p54, %p55
      %p57 = scmp.ne.s32.totalorder %s49, %s51
      %p58 = scmp.eq.s32.totalorder %s20, 1
      %p59 = por %p57, %p58
      %p60 = scmp.ne.s32.totalorder %s51, %s52
      %p61 = scmp.eq.s32.totalorder %s20, 0
      %p62 = por %p60, %p61
      %p63 = scmp.ne.s32.totalorder %s51, %s52
      %p64 = scmp.eq.s32.totalorder %s21, 1
      %p65 = por %p63, %p64
      %p67 = scmp.ne.s32.totalorder %s52, %s66
      %p68 = scmp.eq.s32.totalorder %s21, 0
      %p69 = por %p67, %p68
      %s71 = sadd.s32 %s70, 1
      %p74 = scmp.eq.s32.totalorder %s15, 1
      %p75 = scmp.ne.s32.totalorder %s70, %s72
      %p76 = scmp.eq.s32.totalorder %s15, 0
      %p77 = por %p75, %p76
      %p78 = scmp.ne.s32.totalorder %s70, %s72
      %p79 = scmp.eq.s32.totalorder %s20, 1
      %p80 = por %p78, %p79
      %p81 = scmp.ne.s32.totalorder %s72, %s73
      %p82 = scmp.eq.s32.totalorder %s20, 0
      %p83 = por %p81, %p82
      %p84 = scmp.ne.s32.totalorder %s72, %s73
      %p85 = scmp.eq.s32.totalorder %s21, 1
      %p86 = por %p84, %p85
      %p88 = scmp.ne.s32.totalorder %s73, %s87
      %p89 = scmp.eq.s32.totalorder %s21, 0
      %p90 = por %p88, %p89
      %s91 = ssub.s32 %s15, %s22
      %p92 = scmp.eq.s32.totalorder %s91, 0
      %s94 = sadd.s32 %s93, 1
      %s95 = scalar_select %p92, %s93, %s94
      %p98 = pneg %p92
      %p99 = scmp.eq.s32.totalorder %s15, 1
      %p100 = por %p98, %p99
      %p101 = scmp.ne.s32.totalorder %s93, %s96
      %p102 = scmp.eq.s32.totalorder %s15, 0
      %p103 = por %p101, %p102
      %p104 = scmp.ne.s32.totalorder %s93, %s96
      %p105 = scmp.eq.s32.totalorder %s20, 1
      %p106 = por %p104, %p105
      %p107 = scmp.ne.s32.totalorder %s96, %s97
      %p108 = scmp.eq.s32.totalorder %s20, 0
      %p109 = por %p107, %p108
      %p110 = scmp.ne.s32.totalorder %s96, %s97
      %p111 = scmp.eq.s32.totalorder %s21, 1
      %p112 = por %p110, %p111
      %p114 = scmp.ne.s32.totalorder %s97, %s113
      %p115 = scmp.eq.s32.totalorder %s21, 0
      %p116 = por %p114, %p115
      %p117 = scmp.le.s32.totalorder 1, %s15
      %p118 = scmp.lt.s32.totalorder %s15, 3
      %p119 = pnand %p117, %p118
      %p120 = pneg %p119
      // Predicated region
      $region9: #{tpu_custom_call.1} parent=5 // pred_check
        _
      $region10: #{tpu_custom_call.1} parent=5 // pred_check_branch
        %122 = sbr.rel (%p119) target = $region12
      $region11: #{tpu_custom_call.1} parent=5 // pred_region
        %s123 = ssub.s32 %s15, 1
        // Predicated region
        $region13: #{tpu_custom_call.1} parent=11 // pred_check
          %p124 = pneg %p62
        $region14: #{tpu_custom_call.1} parent=11 // pred_check_branch
          %126 = sbr.rel (%p124) target = $region16
        $region15: #{tpu_custom_call.1} parent=11 // pred_region
          _
        $region16: #{tpu_custom_call.1} parent=11 // pred_fallthru
          _
        // Predicated region
        $region17: #{tpu_custom_call.1} parent=11 // pred_check
          %p127 = pneg %p83
        $region18: #{tpu_custom_call.1} parent=11 // pred_check_branch
          %129 = sbr.rel (%p127) target = $region20
        $region19: #{tpu_custom_call.1} parent=11 // pred_region
          _
        $region20: #{tpu_custom_call.1} parent=11 // pred_fallthru
          _
      $region12: #{tpu_custom_call.1} parent=5 // pred_fallthru
        _
      %p130 = scmp.lt.s32.totalorder %s15, 2
      // Predicated region
      $region21: #{tpu_custom_call.1} parent=5 // pred_check
        %p131 = pneg %p130
      $region22: #{tpu_custom_call.1} parent=5 // pred_check_branch
        %133 = sbr.rel (%p131) target = $region24
      $region23: #{tpu_custom_call.1} parent=5 // pred_region
        // Predicated region
        $region25: #{tpu_custom_call.1} parent=23 // pred_check
          %p134 = pneg %p35
        $region26: #{tpu_custom_call.1} parent=23 // pred_check_branch
          %136 = sbr.rel (%p134) target = $region28
        $region27: #{tpu_custom_call.1} parent=23 // pred_region
          %s137 = sand.u32 %s25, 1
          %s138 = scalar_lea.sflag [#allocation3], %s137
          %s139 = sand.u32 %s25, 1
          %s140 = smul.addr %s139, 64
          %s141 = scalar_lea.vmem [#allocation2], %s140
          %s143 = ssub.s32 1024, 1024
          %144 = vsyncadd %s138, %s143
          %s145 = smul.addr %s15, 8
          %s146 = smul.addr %s145, 128
          %s147 = scalar_lea.hbm %s0, %s146
          %s148 = sshll.u32 %s141, 4
          %s149 = int_to_ptr.vmem [resolvable:$true] %s148
          %154 = dma.hbm_to_vmem [thread:$0]  %s147, 1024, %s149, %s138, 128, 128, 8
        $region28: #{tpu_custom_call.1} parent=23 // pred_fallthru
          _
      $region24: #{tpu_custom_call.1} parent=5 // pred_fallthru
        _
      %p155 = scmp.le.s32.totalorder 1, %s15
      %p156 = scmp.lt.s32.totalorder %s15, 3
      %p157 = pnand %p155, %p156
      %p158 = pneg %p157
      // Predicated region
      $region29: #{tpu_custom_call.1} parent=5 // pred_check
        _
      $region30: #{tpu_custom_call.1} parent=5 // pred_check_branch
        %160 = sbr.rel (%p157) target = $region32
      $region31: #{tpu_custom_call.1} parent=5 // pred_region
        %s161 = ssub.s32 %s15, 1
        %s162 = sand.u32 %s28, 1
        %s163 = scalar_lea.sflag [#allocation3], %s162
        %s164 = sand.u32 %s28, 1
        %s165 = smul.addr %s164, 64
        %s166 = scalar_lea.vmem [#allocation2], %s165
        // Predicated region
        $region33: #{tpu_custom_call.1} parent=31 // pred_check
          %p167 = pneg %p41
        $region34: #{tpu_custom_call.1} parent=31 // pred_check_branch
          %169 = sbr.rel (%p167) target = $region36
        $region35: #{tpu_custom_call.1} parent=31 // pred_region
          %170 = dma.done %s163, 1024
        $region36: #{tpu_custom_call.1} parent=31 // pred_fallthru
          _
        %s171 = sand.u32 %s28, 1
        %s172 = scalar_lea.sflag [#allocation3], %s171
        %s173 = sand.u32 %s28, 1
        %s174 = smul.addr %s173, 64
        %s175 = scalar_lea.vmem [#allocation2], %s174
        %p176 = pneg %p41
        %p177 = pneg %p38
        %p178 = pneg %p62
        %p179 = pneg %p59
        %p180 = pneg %p83
        %p181 = pneg %p80
        %p182 = pneg %p109
        %p183 = pneg %p106
        %s184 = sand.u32 %s96, 1
        %s185 = scalar_lea.sflag [#allocation4], %s184
        %s186 = sand.u32 %s96, 1
        %s187 = smul.addr %s186, 64
        %s188 = scalar_lea.vmem [#allocation5], %s187
        %v189 = vld [vmem:[%s166] sm:$0xff]
        %v190 = vld [vmem:[%s166 + $0x8] sm:$0xff]
        %v191 = vld [vmem:[%s166 + $0x10] sm:$0xff]
        %v192 = vld [vmem:[%s166 + $0x18] sm:$0xff]
        %v193 = vld [vmem:[%s166 + $0x20] sm:$0xff]
        %v194 = vld [vmem:[%s166 + $0x28] sm:$0xff]
        %v195 = vld [vmem:[%s166 + $0x30] sm:$0xff]
        %v196 = vld [vmem:[%s166 + $0x38] sm:$0xff]
        %v197 = vmul.f32 %v189, %v189
        %v198 = vmul.f32 %v190, %v190
        %v199 = vmul.f32 %v191, %v191
        %v200 = vmul.f32 %v192, %v192
        %v201 = vmul.f32 %v193, %v193
        %v202 = vmul.f32 %v194, %v194
        %v203 = vmul.f32 %v195, %v195
        %v204 = vmul.f32 %v196, %v196
        %v205 = vadd.f32 %v197, %v198
        %v206 = vadd.f32 %v205, %v199
        %v207 = vadd.f32 %v206, %v200
        %v208 = vadd.f32 %v207, %v201
        %v209 = vadd.f32 %v208, %v202
        %v210 = vadd.f32 %v209, %v203
        %v211 = vadd.f32 %v210, %v204
        %v212 = vrot.slane %v211, 4
        %v213 = vadd.f32 %v211, %v212
        %v214 = vrot.slane %v213, 2
        %v215 = vadd.f32 %v213, %v214
        %v216 = vrot.slane %v215, 1
        %v217 = vadd.f32 %v215, %v216
        %v218 = vlaneseq
        %v219 = vshrl.u32 %v218, 7
        %v220 = vadd.s32 %v219, 8
        %v221 = vadd.s32 %v219, 16
        %v222 = vadd.s32 %v219, 24
        %v223 = vadd.s32 %v219, 32
        %v224 = vadd.s32 %v219, 40
        %v225 = vadd.s32 %v219, 48
        %v226 = vadd.s32 %v219, 56
        %v227 = vadd.s32 %v219, 64
        %v228 = vadd.s32 %v219, 72
        %v229 = vadd.s32 %v219, 80
        %v230 = vadd.s32 %v219, 88
        %v231 = vadd.s32 %v219, 96
        %v232 = vadd.s32 %v219, 104
        %v233 = vadd.s32 %v219, 112
        %v234 = vadd.s32 %v219, 120
        %v235 = vlaneseq
        %v236 = vand.u32 %v235, 127
        %vm237 = vcmp.lt.s32.totalorder %v219, 0
        %v238 = vsub.s32 0, %v219
        %v239 = vsel %vm237, %v238, %v219
        %v240 = vshrl.u32 %v239, 5
        %v241 = vand.u32 %v239, 31
        %v242 = vsub.s32 0, %v241
        %v243 = vsel %vm237, %v242, %v241
        %vm244 = vcmp.lt.s32.totalorder %v220, 0
        %v245 = vsub.s32 0, %v220
        %v246 = vsel %vm244, %v245, %v220
        %v247 = vshrl.u32 %v246, 5
        %v248 = vand.u32 %v246, 31
        %v249 = vsub.s32 0, %v248
        %v250 = vsel %vm244, %v249, %v248
        %vm251 = vcmp.lt.s32.totalorder %v221, 0
        %v252 = vsub.s32 0, %v221
        %v253 = vsel %vm251, %v252, %v221
        %v254 = vshrl.u32 %v253, 5
        %v255 = vand.u32 %v253, 31
        %v256 = vsub.s32 0, %v255
        %v257 = vsel %vm251, %v256, %v255
        %vm258 = vcmp.lt.s32.totalorder %v222, 0
        %v259 = vsub.s32 0, %v222
        %v260 = vsel %vm258, %v259, %v222
        %v261 = vshrl.u32 %v260, 5
        %v262 = vand.u32 %v260, 31
        %v263 = vsub.s32 0, %v262
        %v264 = vsel %vm258, %v263, %v262
        %vm265 = vcmp.lt.s32.totalorder %v223, 0
        %v266 = vsub.s32 0, %v223
        %v267 = vsel %vm265, %v266, %v223
        %v268 = vshrl.u32 %v267, 5
        %v269 = vand.u32 %v267, 31
        %v270 = vsub.s32 0, %v269
        %v271 = vsel %vm265, %v270, %v269
        %vm272 = vcmp.lt.s32.totalorder %v224, 0
        %v273 = vsub.s32 0, %v224
        %v274 = vsel %vm272, %v273, %v224
        %v275 = vshrl.u32 %v274, 5
        %v276 = vand.u32 %v274, 31
        %v277 = vsub.s32 0, %v276
        %v278 = vsel %vm272, %v277, %v276
        %vm279 = vcmp.lt.s32.totalorder %v225, 0
        %v280 = vsub.s32 0, %v225
        %v281 = vsel %vm279, %v280, %v225
        %v282 = vshrl.u32 %v281, 5
        %v283 = vand.u32 %v281, 31
        %v284 = vsub.s32 0, %v283
        %v285 = vsel %vm279, %v284, %v283
        %vm286 = vcmp.lt.s32.totalorder %v226, 0
        %v287 = vsub.s32 0, %v226
        %v288 = vsel %vm286, %v287, %v226
        %v289 = vshrl.u32 %v288, 5
        %v290 = vand.u32 %v288, 31
        %v291 = vsub.s32 0, %v290
        %v292 = vsel %vm286, %v291, %v290
        %vm293 = vcmp.lt.s32.totalorder %v227, 0
        %v294 = vsub.s32 0, %v227
        %v295 = vsel %vm293, %v294, %v227
        %v296 = vshrl.u32 %v295, 5
        %v297 = vand.u32 %v295, 31
        %v298 = vsub.s32 0, %v297
        %v299 = vsel %vm293, %v298, %v297
        %vm300 = vcmp.lt.s32.totalorder %v228, 0
        %v301 = vsub.s32 0, %v228
        %v302 = vsel %vm300, %v301, %v228
        %v303 = vshrl.u32 %v302, 5
        %v304 = vand.u32 %v302, 31
        %v305 = vsub.s32 0, %v304
        %v306 = vsel %vm300, %v305, %v304
        %vm307 = vcmp.lt.s32.totalorder %v229, 0
        %v308 = vsub.s32 0, %v229
        %v309 = vsel %vm307, %v308, %v229
        %v310 = vshrl.u32 %v309, 5
        %v311 = vand.u32 %v309, 31
        %v312 = vsub.s32 0, %v311
        %v313 = vsel %vm307, %v312, %v311
        %vm314 = vcmp.lt.s32.totalorder %v230, 0
        %v315 = vsub.s32 0, %v230
        %v316 = vsel %vm314, %v315, %v230
        %v317 = vshrl.u32 %v316, 5
        %v318 = vand.u32 %v316, 31
        %v319 = vsub.s32 0, %v318
        %v320 = vsel %vm314, %v319, %v318
        %vm321 = vcmp.lt.s32.totalorder %v231, 0
        %v322 = vsub.s32 0, %v231
        %v323 = vsel %vm321, %v322, %v231
        %v324 = vshrl.u32 %v323, 5
        %v325 = vand.u32 %v323, 31
        %v326 = vsub.s32 0, %v325
        %v327 = vsel %vm321, %v326, %v325
        %vm328 = vcmp.lt.s32.totalorder %v232, 0
        %v329 = vsub.s32 0, %v232
        %v330 = vsel %vm328, %v329, %v232
        %v331 = vshrl.u32 %v330, 5
        %v332 = vand.u32 %v330, 31
        %v333 = vsub.s32 0, %v332
        %v334 = vsel %vm328, %v333, %v332
        %vm335 = vcmp.lt.s32.totalorder %v233, 0
        %v336 = vsub.s32 0, %v233
        %v337 = vsel %vm335, %v336, %v233
        %v338 = vshrl.u32 %v337, 5
        %v339 = vand.u32 %v337, 31
        %v340 = vsub.s32 0, %v339
        %v341 = vsel %vm335, %v340, %v339
        %vm342 = vcmp.lt.s32.totalorder %v234, 0
        %v343 = vsub.s32 0, %v234
        %v344 = vsel %vm342, %v343, %v234
        %v345 = vshrl.u32 %v344, 5
        %v346 = vand.u32 %v344, 31
        %v347 = vsub.s32 0, %v346
        %v348 = vsel %vm342, %v347, %v346
        %vm349 = vcmp.ne.s32.totalorder %v243, 0
        %vm350 = vcmp.ne.s32.totalorder %v250, 0
        %vm351 = vcmp.ne.s32.totalorder %v257, 0
        %vm352 = vcmp.ne.s32.totalorder %v264, 0
        %vm353 = vcmp.ne.s32.totalorder %v271, 0
        %vm354 = vcmp.ne.s32.totalorder %v278, 0
        %vm355 = vcmp.ne.s32.totalorder %v285, 0
        %vm356 = vcmp.ne.s32.totalorder %v292, 0
        %vm357 = vcmp.ne.s32.totalorder %v299, 0
        %vm358 = vcmp.ne.s32.totalorder %v306, 0
        %vm359 = vcmp.ne.s32.totalorder %v313, 0
        %vm360 = vcmp.ne.s32.totalorder %v320, 0
        %vm361 = vcmp.ne.s32.totalorder %v327, 0
        %vm362 = vcmp.ne.s32.totalorder %v334, 0
        %vm363 = vcmp.ne.s32.totalorder %v341, 0
        %vm364 = vcmp.ne.s32.totalorder %v348, 0
        %vm365 = vcmp.lt.s32.totalorder %v243, 0
        %vm366 = vcmp.lt.s32.totalorder %v250, 0
        %vm367 = vcmp.lt.s32.totalorder %v257, 0
        %vm368 = vcmp.lt.s32.totalorder %v264, 0
        %vm369 = vcmp.lt.s32.totalorder %v271, 0
        %vm370 = vcmp.lt.s32.totalorder %v278, 0
        %vm371 = vcmp.lt.s32.totalorder %v285, 0
        %vm372 = vcmp.lt.s32.totalorder %v292, 0
        %vm373 = vcmp.lt.s32.totalorder %v299, 0
        %vm374 = vcmp.lt.s32.totalorder %v306, 0
        %vm375 = vcmp.lt.s32.totalorder %v313, 0
        %vm376 = vcmp.lt.s32.totalorder %v320, 0
        %vm377 = vcmp.lt.s32.totalorder %v327, 0
        %vm378 = vcmp.lt.s32.totalorder %v334, 0
        %vm379 = vcmp.lt.s32.totalorder %v341, 0
        %vm380 = vcmp.lt.s32.totalorder %v348, 0
        %vm381 = vmand %vm365, %vm349
        %vm382 = vmand %vm366, %vm350
        %vm383 = vmand %vm367, %vm351
        %vm384 = vmand %vm368, %vm352
        %vm385 = vmand %vm369, %vm353
        %vm386 = vmand %vm370, %vm354
        %vm387 = vmand %vm371, %vm355
        %vm388 = vmand %vm372, %vm356
        %vm389 = vmand %vm373, %vm357
        %vm390 = vmand %vm374, %vm358
        %vm391 = vmand %vm375, %vm359
        %vm392 = vmand %vm376, %vm360
        %vm393 = vmand %vm377, %vm361
        %vm394 = vmand %vm378, %vm362
        %vm395 = vmand %vm379, %vm363
        %vm396 = vmand %vm380, %vm364
        %v397 = vadd.s32 %v243, 32
        %v398 = vadd.s32 %v250, 32
        %v399 = vadd.s32 %v257, 32
        %v400 = vadd.s32 %v264, 32
        %v401 = vadd.s32 %v271, 32
        %v402 = vadd.s32 %v278, 32
        %v403 = vadd.s32 %v285, 32
        %v404 = vadd.s32 %v292, 32
        %v405 = vadd.s32 %v299, 32
        %v406 = vadd.s32 %v306, 32
        %v407 = vadd.s32 %v313, 32
        %v408 = vadd.s32 %v320, 32
        %v409 = vadd.s32 %v327, 32
        %v410 = vadd.s32 %v334, 32
        %v411 = vadd.s32 %v341, 32
        %v412 = vadd.s32 %v348, 32
        %v413 = vsel %vm381, %v397, %v243
        %v414 = vsel %vm382, %v398, %v250
        %v415 = vsel %vm383, %v399, %v257
        %v416 = vsel %vm384, %v400, %v264
        %v417 = vsel %vm385, %v401, %v271
        %v418 = vsel %vm386, %v402, %v278
        %v419 = vsel %vm387, %v403, %v285
        %v420 = vsel %vm388, %v404, %v292
        %v421 = vsel %vm389, %v405, %v299
        %v422 = vsel %vm390, %v406, %v306
        %v423 = vsel %vm391, %v407, %v313
        %v424 = vsel %vm392, %v408, %v320
        %v425 = vsel %vm393, %v409, %v327
        %v426 = vsel %vm394, %v410, %v334
        %v427 = vsel %vm395, %v411, %v341
        %v428 = vsel %vm396, %v412, %v348
        %vm429 = vcmp.eq.s32.totalorder %v413, %v236
        %vm430 = vcmp.eq.s32.totalorder %v414, %v236
        %vm431 = vcmp.eq.s32.totalorder %v415, %v236
        %vm432 = vcmp.eq.s32.totalorder %v416, %v236
        %vm433 = vcmp.eq.s32.totalorder %v417, %v236
        %vm434 = vcmp.eq.s32.totalorder %v418, %v236
        %vm435 = vcmp.eq.s32.totalorder %v419, %v236
        %vm436 = vcmp.eq.s32.totalorder %v420, %v236
        %vm437 = vcmp.eq.s32.totalorder %v421, %v236
        %vm438 = vcmp.eq.s32.totalorder %v422, %v236
        %vm439 = vcmp.eq.s32.totalorder %v423, %v236
        %vm440 = vcmp.eq.s32.totalorder %v424, %v236
        %vm441 = vcmp.eq.s32.totalorder %v425, %v236
        %vm442 = vcmp.eq.s32.totalorder %v426, %v236
        %vm443 = vcmp.eq.s32.totalorder %v427, %v236
        %vm444 = vcmp.eq.s32.totalorder %v428, %v236
        %v445 = vsel %vm429, 1, 0
        %v446 = vsel %vm430, 1, 0
        %v447 = vsel %vm431, 1, 0
        %v448 = vsel %vm432, 1, 0
        %v449 = vsel %vm433, 1, 0
        %v450 = vsel %vm434, 1, 0
        %v451 = vsel %vm435, 1, 0
        %v452 = vsel %vm436, 1, 0
        %v453 = vsel %vm437, 1, 0
        %v454 = vsel %vm438, 1, 0
        %v455 = vsel %vm439, 1, 0
        %v456 = vsel %vm440, 1, 0
        %v457 = vsel %vm441, 1, 0
        %v458 = vsel %vm442, 1, 0
        %v459 = vsel %vm443, 1, 0
        %v460 = vsel %vm444, 1, 0
        %v461 = vcvt.s32.f32 %v445
        %v462 = vcvt.s32.f32 %v446
        %v463 = vcvt.s32.f32 %v447
        %v464 = vcvt.s32.f32 %v448
        %v465 = vcvt.s32.f32 %v449
        %v466 = vcvt.s32.f32 %v450
        %v467 = vcvt.s32.f32 %v451
        %v468 = vcvt.s32.f32 %v452
        %v469 = vcvt.s32.f32 %v453
        %v470 = vcvt.s32.f32 %v454
        %v471 = vcvt.s32.f32 %v455
        %v472 = vcvt.s32.f32 %v456
        %v473 = vcvt.s32.f32 %v457
        %v474 = vcvt.s32.f32 %v458
        %v475 = vcvt.s32.f32 %v459
        %v476 = vcvt.s32.f32 %v460
        %477 = vmatprep.subr.mxu0 0.0
        %478 = vmatpush1.msra.mxu0 %v461
        %479 = vmatprep.subr.mxu0 0.0
        %480 = vmatpush1.msra.mxu0 %v462
        %481 = vmatprep.subr.mxu0 0.0
        %482 = vmatpush1.msra.mxu0 %v463
        %483 = vmatprep.subr.mxu0 0.0
        %484 = vmatpush1.msra.mxu0 %v464
        %485 = vmatprep.subr.mxu0 0.0
        %486 = vmatpush1.msra.mxu0 %v465
        %487 = vmatprep.subr.mxu0 0.0
        %488 = vmatpush1.msra.mxu0 %v466
        %489 = vmatprep.subr.mxu0 0.0
        %490 = vmatpush1.msra.mxu0 %v467
        %491 = vmatprep.subr.mxu0 0.0
        %492 = vmatpush1.msra.mxu0 %v468
        %493 = vmatprep.subr.mxu0 0.0
        %494 = vmatpush1.msra.mxu0 %v469
        %495 = vmatprep.subr.mxu0 0.0
        %496 = vmatpush1.msra.mxu0 %v470
        %497 = vmatprep.subr.mxu0 0.0
        %498 = vmatpush1.msra.mxu0 %v471
        %499 = vmatprep.subr.mxu0 0.0
        %500 = vmatpush1.msra.mxu0 %v472
        %501 = vmatprep.subr.mxu0 0.0
        %502 = vmatpush1.msra.mxu0 %v473
        %503 = vmatprep.subr.mxu0 0.0
        %504 = vmatpush1.msra.mxu0 %v474
        %505 = vmatprep.subr.mxu0 0.0
        %506 = vmatpush1.msra.mxu0 %v475
        %507 = vmatprep.subr.mxu0 0.0
        %508 = vmatpush1.msra.mxu0 %v476
        %509 = vmatprep.subr.mxu0 0.0
        %510 = vmatpush1.msra.mxu0 0.0
        %511 = vmatprep.subr.mxu0 0.0
        %512 = vmatpush1.msra.mxu0 0.0
        %513 = vmatprep.subr.mxu0 0.0
        %514 = vmatpush1.msra.mxu0 0.0
        %515 = vmatprep.subr.mxu0 0.0
        %516 = vmatpush1.msra.mxu0 0.0
        %517 = vmatprep.subr.mxu0 0.0
        %518 = vmatpush1.msra.mxu0 0.0
        %519 = vmatprep.subr.mxu0 0.0
        %520 = vmatpush1.msra.mxu0 0.0
        %521 = vmatprep.subr.mxu0 0.0
        %522 = vmatpush1.msra.mxu0 0.0
        %523 = vmatprep.subr.mxu0 0.0
        %524 = vmatpush1.msra.mxu0 0.0
        %525 = vmatprep.subr.mxu0 0.0
        %526 = vmatpush1.msra.mxu0 0.0
        %527 = vmatprep.subr.mxu0 0.0
        %528 = vmatpush1.msra.mxu0 0.0
        %529 = vmatprep.subr.mxu0 0.0
        %530 = vmatpush1.msra.mxu0 0.0
        %531 = vmatprep.subr.mxu0 0.0
        %532 = vmatpush1.msra.mxu0 0.0
        %533 = vmatprep.subr.mxu0 0.0
        %534 = vmatpush1.msra.mxu0 0.0
        %535 = vmatprep.subr.mxu0 0.0
        %536 = vmatpush1.msra.mxu0 0.0
        %537 = vmatprep.subr.mxu0 0.0
        %538 = vmatpush1.msra.mxu0 0.0
        %539 = vmatprep.subr.mxu0 0.0
        %540 = vmatpush1.msra.mxu0 0.0
        %541 = vmatprep.mubr.f32.mxu0 0.0
        %542 = vmatmul.mubr.f32.gmra.mrb[0].mxu0 %v217
        %v543 = vpop.f32.mrb[0].mxu0
        %v544 = vadd.f32 0.0, %v543
        %v545 = vpop.f32.mrb[0].mxu0
        %546 = vdwg.mxu0
        %v547 = vrsqrt.pop %v544
        %v548 = vmul.f32 %v544, %v547
        %vm549 = vcmp.eq.f32.partialorder %v544, inf
        %v550 = vsel %vm549, %v544, %v548
        %vm551 = vcmp.eq.f32.partialorder %v544, 0.0
        %v552 = vand.u32 %v544, 2147483648
        %v553 = vsel %vm551, %v552, %v550
        %vm554 = vcmask 253952
        %v555 = vsel %vm554, %v553, 0.0
        %556 = vadd.xlane.f32.xlu0 %v555
        %v557 = vpop.xlane.xlu0 %556
        %v558 = vrcp.pop 32.0
        %v559 = vmul.f32 %v557, %v558
        %v560 = vadd.f32 %v559, 1e-06
        %v561 = vrcp.pop %v560
        %v562 = vmul.f32 %v553, %v561
        %v563 = vld [vmem:[%s1] sm:$0x1]
        %v564 = vmul.f32 %v563, %v562
        %v565 = vadd.f32 %v564, 1.0
        %v566 = vld [vmem:[%s2] sm:$0x1]
        %vm567 = vcmp.lt.s32.totalorder %v236, 0
        %v568 = vsub.s32 0, %v236
        %v569 = vsel %vm567, %v568, %v236
        %v570 = vshrl.u32 %v569, 5
        %v571 = vand.u32 %v569, 31
        %v572 = vsub.s32 0, %v571
        %v573 = vsel %vm567, %v572, %v571
        %vm574 = vcmp.ne.s32.totalorder %v573, 0
        %vm575 = vcmp.lt.s32.totalorder %v573, 0
        %vm576 = vmand %vm575, %vm574
        %v577 = vadd.s32 %v573, 32
        %v578 = vsel %vm576, %v577, %v573
        %vm579 = vcmp.eq.s32.totalorder %v578, %v219
        %vm580 = vcmp.eq.s32.totalorder %v578, %v220
        %vm581 = vcmp.eq.s32.totalorder %v578, %v221
        %vm582 = vcmp.eq.s32.totalorder %v578, %v222
        %v583 = vsel %vm579, 1, 0
        %v584 = vsel %vm580, 1, 0
        %v585 = vsel %vm581, 1, 0
        %v586 = vsel %vm582, 1, 0
        %v587 = vcvt.s32.f32 %v583
        %v588 = vcvt.s32.f32 %v584
        %v589 = vcvt.s32.f32 %v585
        %v590 = vcvt.s32.f32 %v586
        %vm591 = vcmask 261120
        %v593 = vsel %vm591, %v565, 0
        %595 = vmatprep.subr.mxu0 0.0
        %596 = vmatpush1.msra.mxu0 %v587
        %597 = vmatprep.subr.mxu0 0.0
        %598 = vmatpush1.msra.mxu0 %v588
        %599 = vmatprep.subr.mxu0 0.0
        %600 = vmatpush1.msra.mxu0 %v589
        %601 = vmatprep.subr.mxu0 0.0
        %602 = vmatpush1.msra.mxu0 %v590
        %603 = vmatprep.subr.mxu0 0.0
        %604 = vmatpush1.msra.mxu0 0.0
        %605 = vmatprep.subr.mxu0 0.0
        %606 = vmatpush1.msra.mxu0 0.0
        %607 = vmatprep.subr.mxu0 0.0
        %608 = vmatpush1.msra.mxu0 0.0
        %609 = vmatprep.subr.mxu0 0.0
        %610 = vmatpush1.msra.mxu0 0.0
        %611 = vmatprep.subr.mxu0 0.0
        %612 = vmatpush1.msra.mxu0 0.0
        %613 = vmatprep.subr.mxu0 0.0
        %614 = vmatpush1.msra.mxu0 0.0
        %615 = vmatprep.subr.mxu0 0.0
        %616 = vmatpush1.msra.mxu0 0.0
        %617 = vmatprep.subr.mxu0 0.0
        %618 = vmatpush1.msra.mxu0 0.0
        %619 = vmatprep.subr.mxu0 0.0
        %620 = vmatpush1.msra.mxu0 0.0
        %621 = vmatprep.subr.mxu0 0.0
        %622 = vmatpush1.msra.mxu0 0.0
        %623 = vmatprep.subr.mxu0 0.0
        %624 = vmatpush1.msra.mxu0 0.0
        %625 = vmatprep.subr.mxu0 0.0
        %626 = vmatpush1.msra.mxu0 0.0
        %627 = vmatprep.subr.mxu0 0.0
        %628 = vmatpush1.msra.mxu0 0.0
        %629 = vmatprep.subr.mxu0 0.0
        %630 = vmatpush1.msra.mxu0 0.0
        %631 = vmatprep.subr.mxu0 0.0
        %632 = vmatpush1.msra.mxu0 0.0
        %633 = vmatprep.subr.mxu0 0.0
        %634 = vmatpush1.msra.mxu0 0.0
        %635 = vmatprep.subr.mxu0 0.0
        %636 = vmatpush1.msra.mxu0 0.0
        %637 = vmatprep.subr.mxu0 0.0
        %638 = vmatpush1.msra.mxu0 0.0
        %639 = vmatprep.subr.mxu0 0.0
        %640 = vmatpush1.msra.mxu0 0.0
        %641 = vmatprep.subr.mxu0 0.0
        %642 = vmatpush1.msra.mxu0 0.0
        %643 = vmatprep.subr.mxu0 0.0
        %644 = vmatpush1.msra.mxu0 0.0
        %645 = vmatprep.subr.mxu0 0.0
        %646 = vmatpush1.msra.mxu0 0.0
        %647 = vmatprep.subr.mxu0 0.0
        %648 = vmatpush1.msra.mxu0 0.0
        %649 = vmatprep.subr.mxu0 0.0
        %650 = vmatpush1.msra.mxu0 0.0
        %651 = vmatprep.subr.mxu0 0.0
        %652 = vmatpush1.msra.mxu0 0.0
        %653 = vmatprep.subr.mxu0 0.0
        %654 = vmatpush1.msra.mxu0 0.0
        %655 = vmatprep.subr.mxu0 0.0
        %656 = vmatpush1.msra.mxu0 0.0
        %657 = vmatprep.subr.mxu0 0.0
        %658 = vmatpush1.msra.mxu0 0.0
        %659 = vmatprep.mubr.f32.mxu0 0.0
        %660 = vmatmul.mubr.f32.gmra.mrb[0].mxu0 %v593
        %v661 = vpop.f32.mrb[0].mxu0
        %v662 = vadd.f32 0.0, %v661
        %v663 = vpop.f32.mrb[0].mxu0
        %664 = vdwg.mxu0
        %v666 = vsel %vm591, %v566, 0
        %668 = vmatprep.subr.mxu0 0.0
        %669 = vmatpush1.msra.mxu0 %v587
        %670 = vmatprep.subr.mxu0 0.0
        %671 = vmatpush1.msra.mxu0 %v588
        %672 = vmatprep.subr.mxu0 0.0
        %673 = vmatpush1.msra.mxu0 %v589
        %674 = vmatprep.subr.mxu0 0.0
        %675 = vmatpush1.msra.mxu0 %v590
        %676 = vmatprep.subr.mxu0 0.0
        %677 = vmatpush1.msra.mxu0 0.0
        %678 = vmatprep.subr.mxu0 0.0
        %679 = vmatpush1.msra.mxu0 0.0
        %680 = vmatprep.subr.mxu0 0.0
        %681 = vmatpush1.msra.mxu0 0.0
        %682 = vmatprep.subr.mxu0 0.0
        %683 = vmatpush1.msra.mxu0 0.0
        %684 = vmatprep.subr.mxu0 0.0
        %685 = vmatpush1.msra.mxu0 0.0
        %686 = vmatprep.subr.mxu0 0.0
        %687 = vmatpush1.msra.mxu0 0.0
        %688 = vmatprep.subr.mxu0 0.0
        %689 = vmatpush1.msra.mxu0 0.0
        %690 = vmatprep.subr.mxu0 0.0
        %691 = vmatpush1.msra.mxu0 0.0
        %692 = vmatprep.subr.mxu0 0.0
        %693 = vmatpush1.msra.mxu0 0.0
        %694 = vmatprep.subr.mxu0 0.0
        %695 = vmatpush1.msra.mxu0 0.0
        %696 = vmatprep.subr.mxu0 0.0
        %697 = vmatpush1.msra.mxu0 0.0
        %698 = vmatprep.subr.mxu0 0.0
        %699 = vmatpush1.msra.mxu0 0.0
        %700 = vmatprep.subr.mxu0 0.0
        %701 = vmatpush1.msra.mxu0 0.0
        %702 = vmatprep.subr.mxu0 0.0
        %703 = vmatpush1.msra.mxu0 0.0
        %704 = vmatprep.subr.mxu0 0.0
        %705 = vmatpush1.msra.mxu0 0.0
        %706 = vmatprep.subr.mxu0 0.0
        %707 = vmatpush1.msra.mxu0 0.0
        %708 = vmatprep.subr.mxu0 0.0
        %709 = vmatpush1.msra.mxu0 0.0
        %710 = vmatprep.subr.mxu0 0.0
        %711 = vmatpush1.msra.mxu0 0.0
        %712 = vmatprep.subr.mxu0 0.0
        %713 = vmatpush1.msra.mxu0 0.0
        %714 = vmatprep.subr.mxu0 0.0
        %715 = vmatpush1.msra.mxu0 0.0
        %716 = vmatprep.subr.mxu0 0.0
        %717 = vmatpush1.msra.mxu0 0.0
        %718 = vmatprep.subr.mxu0 0.0
        %719 = vmatpush1.msra.mxu0 0.0
        %720 = vmatprep.subr.mxu0 0.0
        %721 = vmatpush1.msra.mxu0 0.0
        %722 = vmatprep.subr.mxu0 0.0
        %723 = vmatpush1.msra.mxu0 0.0
        %724 = vmatprep.subr.mxu0 0.0
        %725 = vmatpush1.msra.mxu0 0.0
        %726 = vmatprep.subr.mxu0 0.0
        %727 = vmatpush1.msra.mxu0 0.0
        %728 = vmatprep.subr.mxu0 0.0
        %729 = vmatpush1.msra.mxu0 0.0
        %730 = vmatprep.subr.mxu0 0.0
        %731 = vmatpush1.msra.mxu0 0.0
        %732 = vmatprep.mubr.f32.mxu0 0.0
        %733 = vmatmul.mubr.f32.gmra.mrb[0].mxu0 %v666
        %v734 = vpop.f32.mrb[0].mxu0
        %v735 = vadd.f32 0.0, %v734
        %v736 = vpop.f32.mrb[0].mxu0
        %737 = vdwg.mxu0
        %v738 = vlaneseq
        %v739 = vshrl.u32 %v738, 7
        %v740 = vsub.s32 0, %v739
        %v741 = vrot.slane %v662, %v740
        %v742 = vmul.f32 %v189, %v741
        %v743 = vmul.f32 %v190, %v741
        %v744 = vmul.f32 %v191, %v741
        %v745 = vmul.f32 %v192, %v741
        %v746 = vmul.f32 %v193, %v741
        %v747 = vmul.f32 %v194, %v741
        %v748 = vmul.f32 %v195, %v741
        %v749 = vmul.f32 %v196, %v741
        %v750 = vlaneseq
        %v751 = vshrl.u32 %v750, 7
        %v752 = vsub.s32 0, %v751
        %v753 = vrot.slane %v735, %v752
        %v754 = vadd.f32 %v742, %v753
        %v755 = vadd.f32 %v743, %v753
        %v756 = vadd.f32 %v744, %v753
        %v757 = vadd.f32 %v745, %v753
        %v758 = vadd.f32 %v746, %v753
        %v759 = vadd.f32 %v747, %v753
        %v760 = vadd.f32 %v748, %v753
        %v761 = vadd.f32 %v749, %v753
        %762 = vst [vmem:[%s188] sm:$0xff] %v754
        %763 = vst [vmem:[%s188 + $0x8] sm:$0xff] %v755
        %764 = vst [vmem:[%s188 + $0x10] sm:$0xff] %v756
        %765 = vst [vmem:[%s188 + $0x18] sm:$0xff] %v757
        %766 = vst [vmem:[%s188 + $0x20] sm:$0xff] %v758
        %767 = vst [vmem:[%s188 + $0x28] sm:$0xff] %v759
        %768 = vst [vmem:[%s188 + $0x30] sm:$0xff] %v760
        %769 = vst [vmem:[%s188 + $0x38] sm:$0xff] %v761
        %s770 = sand.u32 %s96, 1
        %s771 = scalar_lea.sflag [#allocation4], %s770
        %s772 = sand.u32 %s96, 1
        %s773 = smul.addr %s772, 64
        %s774 = scalar_lea.vmem [#allocation5], %s773
        // Predicated region
        $region37: #{tpu_custom_call.1} parent=31 // pred_check
          %p775 = pneg %p106
        $region38: #{tpu_custom_call.1} parent=31 // pred_check_branch
          %777 = sbr.rel (%p775) target = $region40
        $region39: #{tpu_custom_call.1} parent=31 // pred_region
          %s779 = ssub.s32 1024, 1024
          %780 = vsyncadd %s771, %s779
          %s781 = smul.addr %s20, 8
          %s782 = smul.addr %s781, 128
          %s783 = scalar_lea.hbm %s3, %s782
          %s784 = sshll.u32 %s774, 4
          %s785 = int_to_ptr.vmem [resolvable:$true] %s784
          %790 = dma.vmem_to_hbm [thread:$0]  %s785, 1024, %s783, %s771, 128, 128, 8
        $region40: #{tpu_custom_call.1} parent=31 // pred_fallthru
          _
      $region32: #{tpu_custom_call.1} parent=5 // pred_fallthru
        _
      %p791 = scmp.le.s32.totalorder 2, %s15
      // Predicated region
      $region41: #{tpu_custom_call.1} parent=5 // pred_check
        %p792 = pneg %p791
      $region42: #{tpu_custom_call.1} parent=5 // pred_check_branch
        %794 = sbr.rel (%p792) target = $region44
      $region43: #{tpu_custom_call.1} parent=5 // pred_region
        %s795 = ssub.s32 %s15, 2
        // Predicated region
        $region45: #{tpu_custom_call.1} parent=43 // pred_check
          %p796 = pneg %p112
        $region46: #{tpu_custom_call.1} parent=43 // pred_check_branch
          %798 = sbr.rel (%p796) target = $region48
        $region47: #{tpu_custom_call.1} parent=43 // pred_region
          %s799 = sand.u32 %s97, 1
          %s800 = scalar_lea.sflag [#allocation4], %s799
          %s801 = sand.u32 %s97, 1
          %s802 = smul.addr %s801, 64
          %s803 = scalar_lea.vmem [#allocation5], %s802
          %804 = dma.done %s800, 1024
        $region48: #{tpu_custom_call.1} parent=43 // pred_fallthru
          _
      $region44: #{tpu_custom_call.1} parent=5 // pred_fallthru
        _
    $region6: #{tpu_custom_call.1} parent=1 // loop_footer
      %s19 = sadd.s32 1, %s15
    $region7: #{tpu_custom_call.1} parent=1 // loop_footer_branch
      %14 = sbr.rel target = $region3
    $region8: #{tpu_custom_call.1} parent=1 // loop_exit
      _
    %805 = vsyncpa [#allocation3], 1
    %s806 = scalar_lea.sflag [#allocation3], 1
    %807 = vsyncpa %s806, 1
    %808 = vsyncpa [#allocation4], 1
    %s809 = scalar_lea.sflag [#allocation4], 1
    %810 = vsyncpa %s809, 1

</llo_original>
